<compile_context>
chip_gen: v5e
topology: v5e:2x2
jax: 0.10.0
libtpu: 0.0.40
codegen_flags: <defaults>
</compile_context>

<pallas_src>
import jax
import jax.numpy as jnp
from jax.experimental import pallas as pl
from jax.experimental.pallas import tpu as pltpu


def _round_up(n: int, m: int) -> int:
    return ((n + m - 1) // m) * m


# --------------------------------------------------------------------------- #
# Kernel body
# --------------------------------------------------------------------------- #
def ffn_kernel(x_ref, w1_ref, b1_ref, w2_ref, b2_ref, o_ref):
    # Cast the streamed activation tile to the MXU-feed dtype in VMEM (cheap VPU
    # op hidden under DMA); weights were pre-cast once outside the hot path.
    x = x_ref[...].astype(w1_ref.dtype)
    # fc1: (TB, D_in) @ (D_in, H_p) with f32 accumulation; bias + tanh stay f32.
    h = jnp.dot(x, w1_ref[...], preferred_element_type=jnp.float32)
    h = jnp.tanh(h + b1_ref[...])                      # tanh -> EUP, bias -> VPU
    # fc2: (TB, H_p) @ (H_p, D_out_p) with f32 accumulation.
    y = jnp.dot(h.astype(w2_ref.dtype), w2_ref[...],
                preferred_element_type=jnp.float32)
    o_ref[...] = (y + b2_ref[...]).astype(o_ref.dtype)


# --------------------------------------------------------------------------- #
# Parameter preparation (done ONCE, outside the per-call hot path)
# --------------------------------------------------------------------------- #
def prepare_ffn_params(w1, b1, w2, b2, *, compute_dtype=jnp.bfloat16):
    """Lane-pad feature dims to multiples of 128 and cast weights to the MXU
    feed dtype, once.  Returns (w1p, b1p, w2p, b2p, d_out).

    w1: (D_in, H), b1: (H,) or (1, H), w2: (H, D_out), b2: (D_out,) or (1, D_out).
    Padding is exact: zero rows/cols contribute 0, tanh(0+0)=0, padded output
    columns are sliced off in ffn_apply.
    """
    D_in, H = w1.shape
    D_out = w2.shape[1]
    H_p = _round_up(H, 128)
    D_out_p = _round_up(D_out, 128)
    wdt = w1.dtype if compute_dtype is None else compute_dtype

    w1p = jnp.pad(w1, ((0, 0), (0, H_p - H))).astype(wdt)
    w2p = jnp.pad(w2, ((0, H_p - H), (0, D_out_p - D_out))).astype(wdt)
    b1p = jnp.pad(jnp.reshape(b1, (1, -1)).astype(jnp.float32),
                  ((0, 0), (0, H_p - H)))
    b2p = jnp.pad(jnp.reshape(b2, (1, -1)).astype(jnp.float32),
                  ((0, 0), (0, D_out_p - D_out)))
    return (w1p, b1p, w2p, b2p, D_out)


# --------------------------------------------------------------------------- #
# Tiling / VMEM heuristics
# --------------------------------------------------------------------------- #
def _choose_tb(B: int, block_batch: int, pack: int) -> int:
    """Batch tile: multiple of the sublane packing, <= B, and (when possible)
    producing >= 2 grid tiles so v7x's two TensorCores both get work."""
    if B <= pack:
        return B                                   # single full-dim (ragged) block
    if B >= 2 * pack:
        tb = min(block_batch, _round_up(pl.cdiv(B, 2), pack))
    else:
        tb = pack
    return max(pack, min(tb, (B // pack) * pack))


def _vmem_limit_bytes(vmem_est: int) -> int:
    """Generation-aware VMEM limit with headroom for Mosaic internal scratch."""
    try:
        cap = int(pltpu.get_tpu_info().vmem_capacity_bytes)
    except Exception:
        cap = 64 * 1024 * 1024                     # safe default everywhere
    headroom_cap = min(cap - (8 << 20), cap * 7 // 8)   # ~56 MiB v7x, ~112 MiB v5e/v6e
    want = max(32 << 20, vmem_est * 3 // 2 + (1 << 20))
    return max(1 << 20, min(want, headroom_cap))


# --------------------------------------------------------------------------- #
# pallas_call construction + hot-path apply
# --------------------------------------------------------------------------- #
def _ffn_call(x, w1p, b1p, w2p, b2p, *, TB, out_dtype, vmem_limit, weight_mode):
    B, D_in = x.shape
    H_p = w1p.shape[1]
    D_out_p = w2p.shape[1]
    grid = (pl.cdiv(B, TB),)

    def resident(shape):
        kw = {} if weight_mode is None else {"pipeline_mode": weight_mode}
        return pl.BlockSpec(shape, lambda i: (0, 0), **kw)

    return pl.pallas_call(
        ffn_kernel,
        out_shape=jax.ShapeDtypeStruct((B, D_out_p), out_dtype),
        grid_spec=pltpu.PrefetchScalarGridSpec(
            num_scalar_prefetch=0,
            grid=grid,
            in_specs=[
                # activations stream per batch tile (double-buffered)
                pl.BlockSpec((TB, D_in), lambda i: (i, 0)),
                # weights / biases: constant index_map, single-buffered, resident
                resident((D_in, H_p)),
                resident((1, H_p)),
                resident((H_p, D_out_p)),
                resident((1, D_out_p)),
            ],
            out_specs=pl.BlockSpec((TB, D_out_p), lambda i: (i, 0)),
        ),
        compiler_params=pltpu.CompilerParams(
            dimension_semantics=("parallel",),
            vmem_limit_bytes=vmem_limit,
        ),
    )(x, w1p, b1p, w2p, b2p)


def ffn_apply(x, params, *, block_batch=256, out_dtype=None):
    """Hot-path FFN: x (B, D_in), params from prepare_ffn_params()."""
    w1p, b1p, w2p, b2p, d_out = params
    B, D_in = x.shape
    H_p = w1p.shape[1]
    D_out_p = w2p.shape[1]
    out_dtype = x.dtype if out_dtype is None else out_dtype

    w_item = jnp.dtype(w1p.dtype).itemsize
    pack = {1: 32, 2: 16}.get(w_item, 8)           # sublane packing of MXU feed
    TB = _choose_tb(B, block_batch, pack)

    x_item = jnp.dtype(x.dtype).itemsize
    o_item = jnp.dtype(out_dtype).itemsize
    vmem_est = (
        w_item * (D_in * H_p + H_p * D_out_p) + 4 * (H_p + D_out_p)  # resident (1 buffer)
        + 2 * x_item * TB * D_in                                      # streamed x tiles
        + 2 * o_item * TB * D_out_p                                   # streamed out tiles
        + 4 * TB * (H_p + D_out_p)                                    # f32 intermediates
    )
    vmem_limit = _vmem_limit_bytes(vmem_est)

    try:
        out_p = _ffn_call(x, w1p, b1p, w2p, b2p, TB=TB, out_dtype=out_dtype,
                          vmem_limit=vmem_limit, weight_mode=pl.Buffered(1))
    except Exception:
        # Fallback for Pallas versions without single-buffer pipeline_mode.
        out_p = _ffn_call(x, w1p, b1p, w2p, b2p, TB=TB, out_dtype=out_dtype,
                          vmem_limit=vmem_limit, weight_mode=None)

    return out_p if D_out_p == d_out else out_p[:, :d_out]


def ffn_pallas(x, w1, b1, w2, b2, *, compute_dtype=jnp.bfloat16,
               block_batch=256, out_dtype=None):
    """Convenience one-shot wrapper.  For repeated calls, call
    prepare_ffn_params() once and reuse ffn_apply()."""
    params = prepare_ffn_params(w1, b1, w2, b2, compute_dtype=compute_dtype)
    return ffn_apply(x, params, block_batch=block_batch, out_dtype=out_dtype)


def ffn_reference(x, w1, b1, w2, b2):
    h = jnp.tanh(x @ w1 + jnp.reshape(b1, (1, -1)))
    return h @ w2 + jnp.reshape(b2, (1, -1))


# --------------------------------------------------------------------------- #
# Self-test
# --------------------------------------------------------------------------- #
if __name__ == "__main__":
    # Shapes consistent with the module: (batch, input_dim) -> (batch, output_dim)
    batch, input_size, hidden_size, output_size = 8, 32, 64, 16

    key = jax.random.PRNGKey(0)
    kx, k1, kb1, k2, kb2 = jax.random.split(key, 5)

    x = jax.random.normal(kx, (batch, input_size), dtype=jnp.float32)

    # PyTorch Linear default init: U(-1/sqrt(fan_in), 1/sqrt(fan_in))
    lim1 = 1.0 / jnp.sqrt(jnp.float32(input_size))
    w1 = jax.random.uniform(k1, (input_size, hidden_size), jnp.float32, -lim1, lim1)
    b1 = jax.random.uniform(kb1, (hidden_size,), jnp.float32, -lim1, lim1)
    lim2 = 1.0 / jnp.sqrt(jnp.float32(hidden_size))
    w2 = jax.random.uniform(k2, (hidden_size, output_size), jnp.float32, -lim2, lim2)
    b2 = jax.random.uniform(kb2, (output_size,), jnp.float32, -lim2, lim2)

    xb = jax.random.normal(jax.random.PRNGKey(1), (300, input_size), dtype=jnp.float32)
    ref_small = ffn_reference(x, w1, b1, w2, b2)
    ref_big = ffn_reference(xb, w1, b1, w2, b2)

    # 1) exact f32 compute path (tight tolerance)
    p_f32 = prepare_ffn_params(w1, b1, w2, b2, compute_dtype=None)
    out = jax.block_until_ready(ffn_apply(x, p_f32))
    assert out.shape == (batch, output_size)
    assert jnp.allclose(out, ref_small, atol=1e-5, rtol=1e-5), "f32 mismatch (B=8)"
    out2 = jax.block_until_ready(ffn_apply(xb, p_f32))
    assert out2.shape == (300, output_size)
    assert jnp.allclose(out2, ref_big, atol=1e-5, rtol=1e-5), "f32 mismatch (B=300)"

    # 2) default bf16 MXU-feed path (f32 accumulation) -> multi-tile ragged grid
    p_bf16 = prepare_ffn_params(w1, b1, w2, b2)        # bf16 default
    out3 = jax.block_until_ready(ffn_apply(x, p_bf16))
    assert jnp.allclose(out3, ref_small, atol=5e-2, rtol=5e-2), "bf16 mismatch (B=8)"
    out4 = jax.block_until_ready(ffn_apply(xb, p_bf16))
    assert out4.shape == (300, output_size)
    assert jnp.allclose(out4, ref_big, atol=5e-2, rtol=5e-2), "bf16 mismatch (B=300)"

    # 3) one-shot convenience wrapper
    out5 = jax.block_until_ready(ffn_pallas(x, w1, b1, w2, b2))
    assert out5.shape == (batch, output_size)

    print("KERNEL_OK")
</pallas_src>

<mosaic_0001>
module attributes {stable_mosaic.version = 11 : i64} {
  func.func @ffn_kernel(%arg0: i32, %arg1: memref<8x32xf32, #tpu.memory_space<vmem>>, %arg2: memref<32x128xf32, #tpu.memory_space<vmem>>, %arg3: memref<1x128xf32, #tpu.memory_space<vmem>>, %arg4: memref<128x128xf32, #tpu.memory_space<vmem>>, %arg5: memref<1x128xf32, #tpu.memory_space<vmem>>, %arg6: memref<8x128xf32, #tpu.memory_space<vmem>>) attributes {dimension_semantics = [#tpu.dimension_semantics<parallel>], iteration_bounds = array<i64: 1>, scalar_prefetch = 0 : i64, scratch_operands = 0 : i64, tpu.core_type = #tpu.core_type<tc>, window_params = [{transform_indices = @transform_0, window_bounds = array<i64: 8, 32>}, {pipeline_mode = #tpu.pipeline_mode<synchronous>, transform_indices = @transform_1, window_bounds = array<i64: 32, 128>}, {pipeline_mode = #tpu.pipeline_mode<synchronous>, transform_indices = @transform_2, window_bounds = array<i64: 1, 128>}, {pipeline_mode = #tpu.pipeline_mode<synchronous>, transform_indices = @transform_3, window_bounds = array<i64: 128, 128>}, {pipeline_mode = #tpu.pipeline_mode<synchronous>, transform_indices = @transform_4, window_bounds = array<i64: 1, 128>}, {transform_indices = @transform_5, window_bounds = array<i64: 8, 128>}]} {
    %c0 = arith.constant 0 : index
    %c0_0 = arith.constant 0 : index
    %0 = vector.load %arg1[%c0, %c0_0] : memref<8x32xf32, #tpu.memory_space<vmem>>, vector<8x32xf32>
    %c0_1 = arith.constant 0 : index
    %c0_2 = arith.constant 0 : index
    %1 = vector.load %arg2[%c0_1, %c0_2] : memref<32x128xf32, #tpu.memory_space<vmem>>, vector<32x128xf32>
    %cst = arith.constant dense<0.000000e+00> : vector<8x128xf32>
    %2 = tpu.matmul %0, %1, %cst {dimension_numbers = #tpu.dot_dimension_numbers<[1], [0], [0], [1], [0, 0, 1, 1], [], []>} : vector<8x32xf32>, vector<32x128xf32>, vector<8x128xf32> -> vector<8x128xf32>
    %c0_3 = arith.constant 0 : index
    %c0_4 = arith.constant 0 : index
    %3 = vector.load %arg3[%c0_3, %c0_4] : memref<1x128xf32, #tpu.memory_space<vmem>>, vector<1x128xf32>
    %4 = vector.broadcast %3 : vector<1x128xf32> to vector<8x128xf32>
    %5 = arith.addf %2, %4 : vector<8x128xf32>
    %6 = math.tanh %5 : vector<8x128xf32>
    %c0_5 = arith.constant 0 : index
    %c0_6 = arith.constant 0 : index
    %7 = vector.load %arg4[%c0_5, %c0_6] : memref<128x128xf32, #tpu.memory_space<vmem>>, vector<128x128xf32>
    %cst_7 = arith.constant dense<0.000000e+00> : vector<8x128xf32>
    %8 = tpu.matmul %6, %7, %cst_7 {dimension_numbers = #tpu.dot_dimension_numbers<[1], [0], [0], [1], [0, 0, 1, 1], [], []>} : vector<8x128xf32>, vector<128x128xf32>, vector<8x128xf32> -> vector<8x128xf32>
    %c0_8 = arith.constant 0 : index
    %c0_9 = arith.constant 0 : index
    %9 = vector.load %arg5[%c0_8, %c0_9] : memref<1x128xf32, #tpu.memory_space<vmem>>, vector<1x128xf32>
    %10 = vector.broadcast %9 : vector<1x128xf32> to vector<8x128xf32>
    %11 = arith.addf %8, %10 : vector<8x128xf32>
    %c0_10 = arith.constant 0 : index
    %c0_11 = arith.constant 0 : index
    %12 = vector.load %arg6[%c0_10, %c0_11] : memref<8x128xf32, #tpu.memory_space<vmem>>, vector<8x128xf32>
    tpu.vector_store %arg6[%c0_10, %c0_11], %11 {strides = array<i32>} : memref<8x128xf32, #tpu.memory_space<vmem>>, vector<8x128xf32>,
    return
  }
  func.func @transform_0(%arg0: i32) -> (i32, i32) {
    %c0_i32 = arith.constant 0 : i32
    %c0_i32_0 = arith.constant 0 : i32
    return %arg0, %c0_i32 : i32, i32
  }
  func.func @transform_1(%arg0: i32) -> (i32, i32) {
    %c0_i32 = arith.constant 0 : i32
    %c0_i32_0 = arith.constant 0 : i32
    %c0_i32_1 = arith.constant 0 : i32
    return %c0_i32, %c0_i32_0 : i32, i32
  }
  func.func @transform_2(%arg0: i32) -> (i32, i32) {
    %c0_i32 = arith.constant 0 : i32
    %c0_i32_0 = arith.constant 0 : i32
    %c0_i32_1 = arith.constant 0 : i32
    return %c0_i32, %c0_i32_0 : i32, i32
  }
  func.func @transform_3(%arg0: i32) -> (i32, i32) {
    %c0_i32 = arith.constant 0 : i32
    %c0_i32_0 = arith.constant 0 : i32
    %c0_i32_1 = arith.constant 0 : i32
    return %c0_i32, %c0_i32_0 : i32, i32
  }
  func.func @transform_4(%arg0: i32) -> (i32, i32) {
    %c0_i32 = arith.constant 0 : i32
    %c0_i32_0 = arith.constant 0 : i32
    %c0_i32_1 = arith.constant 0 : i32
    return %c0_i32, %c0_i32_0 : i32, i32
  }
  func.func @transform_5(%arg0: i32) -> (i32, i32) {
    %c0_i32 = arith.constant 0 : i32
    %c0_i32_0 = arith.constant 0 : i32
    return %arg0, %c0_i32 : i32, i32
  }
}

module attributes {stable_mosaic.version = 11 : i64} {
  func.func @ffn_kernel(%arg0: i32, %arg1: memref<8x32xf32, #tpu.memory_space<vmem>>, %arg2: memref<32x128xf32, #tpu.memory_space<vmem>>, %arg3: memref<1x128xf32, #tpu.memory_space<vmem>>, %arg4: memref<128x128xf32, #tpu.memory_space<vmem>>, %arg5: memref<1x128xf32, #tpu.memory_space<vmem>>, %arg6: memref<8x128xf32, #tpu.memory_space<vmem>>) attributes {dimension_semantics = [#tpu.dimension_semantics<parallel>], iteration_bounds = array<i64: 1>, scalar_prefetch = 0 : i64, scratch_operands = 0 : i64, tpu.core_type = #tpu.core_type<tc>, window_params = [{transform_indices = @transform_0, window_bounds = array<i64: 8, 32>}, {pipeline_mode = #tpu.pipeline_mode<synchronous>, transform_indices = @transform_1, window_bounds = array<i64: 32, 128>}, {pipeline_mode = #tpu.pipeline_mode<synchronous>, transform_indices = @transform_2, window_bounds = array<i64: 1, 128>}, {pipeline_mode = #tpu.pipeline_mode<synchronous>, transform_indices = @transform_3, window_bounds = array<i64: 128, 128>}, {pipeline_mode = #tpu.pipeline_mode<synchronous>, transform_indices = @transform_4, window_bounds = array<i64: 1, 128>}, {transform_indices = @transform_5, window_bounds = array<i64: 8, 128>}]} {
    %c0 = arith.constant 0 : index
    %c0_0 = arith.constant 0 : index
    %0 = vector.load %arg1[%c0, %c0_0] : memref<8x32xf32, #tpu.memory_space<vmem>>, vector<8x32xf32>
    %c0_1 = arith.constant 0 : index
    %c0_2 = arith.constant 0 : index
    %1 = vector.load %arg2[%c0_1, %c0_2] : memref<32x128xf32, #tpu.memory_space<vmem>>, vector<32x128xf32>
    %cst = arith.constant dense<0.000000e+00> : vector<8x128xf32>
    %2 = tpu.matmul %0, %1, %cst {dimension_numbers = #tpu.dot_dimension_numbers<[1], [0], [0], [1], [0, 0, 1, 1], [], []>} : vector<8x32xf32>, vector<32x128xf32>, vector<8x128xf32> -> vector<8x128xf32>
    %c0_3 = arith.constant 0 : index
    %c0_4 = arith.constant 0 : index
    %3 = vector.load %arg3[%c0_3, %c0_4] : memref<1x128xf32, #tpu.memory_space<vmem>>, vector<1x128xf32>
    %4 = vector.broadcast %3 : vector<1x128xf32> to vector<8x128xf32>
    %5 = arith.addf %2, %4 : vector<8x128xf32>
    %6 = math.tanh %5 : vector<8x128xf32>
    %c0_5 = arith.constant 0 : index
    %c0_6 = arith.constant 0 : index
    %7 = vector.load %arg4[%c0_5, %c0_6] : memref<128x128xf32, #tpu.memory_space<vmem>>, vector<128x128xf32>
    %cst_7 = arith.constant dense<0.000000e+00> : vector<8x128xf32>
    %8 = tpu.matmul %6, %7, %cst_7 {dimension_numbers = #tpu.dot_dimension_numbers<[1], [0], [0], [1], [0, 0, 1, 1], [], []>} : vector<8x128xf32>, vector<128x128xf32>, vector<8x128xf32> -> vector<8x128xf32>
    %c0_8 = arith.constant 0 : index
    %c0_9 = arith.constant 0 : index
    %9 = vector.load %arg5[%c0_8, %c0_9] : memref<1x128xf32, #tpu.memory_space<vmem>>, vector<1x128xf32>
    %10 = vector.broadcast %9 : vector<1x128xf32> to vector<8x128xf32>
    %11 = arith.addf %8, %10 : vector<8x128xf32>
    %c0_10 = arith.constant 0 : index
    %c0_11 = arith.constant 0 : index
    %12 = vector.load %arg6[%c0_10, %c0_11] : memref<8x128xf32, #tpu.memory_space<vmem>>, vector<8x128xf32>
    tpu.vector_store %arg6[%c0_10, %c0_11], %11 {strides = array<i32>} : memref<8x128xf32, #tpu.memory_space<vmem>>, vector<8x128xf32>,
    return
  }
  func.func @transform_0(%arg0: i32) -> (i32, i32) {
    %c0_i32 = arith.constant 0 : i32
    %c0_i32_0 = arith.constant 0 : i32
    return %arg0, %c0_i32 : i32, i32
  }
  func.func @transform_1(%arg0: i32) -> (i32, i32) {
    %c0_i32 = arith.constant 0 : i32
    %c0_i32_0 = arith.constant 0 : i32
    %c0_i32_1 = arith.constant 0 : i32
    return %c0_i32, %c0_i32_0 : i32, i32
  }
  func.func @transform_2(%arg0: i32) -> (i32, i32) {
    %c0_i32 = arith.constant 0 : i32
    %c0_i32_0 = arith.constant 0 : i32
    %c0_i32_1 = arith.constant 0 : i32
    return %c0_i32, %c0_i32_0 : i32, i32
  }
  func.func @transform_3(%arg0: i32) -> (i32, i32) {
    %c0_i32 = arith.constant 0 : i32
    %c0_i32_0 = arith.constant 0 : i32
    %c0_i32_1 = arith.constant 0 : i32
    return %c0_i32, %c0_i32_0 : i32, i32
  }
  func.func @transform_4(%arg0: i32) -> (i32, i32) {
    %c0_i32 = arith.constant 0 : i32
    %c0_i32_0 = arith.constant 0 : i32
    %c0_i32_1 = arith.constant 0 : i32
    return %c0_i32, %c0_i32_0 : i32, i32
  }
  func.func @transform_5(%arg0: i32) -> (i32, i32) {
    %c0_i32 = arith.constant 0 : i32
    %c0_i32_0 = arith.constant 0 : i32
    return %arg0, %c0_i32 : i32, i32
  }
}

</mosaic_0001>

<llo_original>
// kernel: tpu_custom_call.1
$region0: #{tpu_custom_call.1}
  #allocation0 [shape = 'u32[]', space=smem, size = 0x4, offset = 0x4, fixed_abs, tag = 'smem constant byte address 0x4 - core index']
  #allocation1 [shape = 'u32[72,128]{1,0:T(1,128)}', space=vmem, size = 0x9000, scoped, tag = 'internal scratch']
  %s0 = inlined_call_operand.hbm [shape: f32[8,32], index: 0, kind: input, shape index: {}]
  %s1 = inlined_call_operand.hbm [shape: f32[32,128], index: 1, kind: input, shape index: {}]
  %s2 = inlined_call_operand.vmem [shape: f32[1,128], index: 2, kind: input, shape index: {}]
  %s3 = inlined_call_operand.hbm [shape: f32[128,128], index: 3, kind: input, shape index: {}]
  %s4 = inlined_call_operand.vmem [shape: f32[1,128], index: 4, kind: input, shape index: {}]
  %s5 = inlined_call_operand.hbm [shape: f32[8,128], index: 5, kind: output, shape index: {}]
  %s6 = sld [smem:[#allocation0]]
  $region42: #{tpu_custom_call.1} parent=0
    _
  %s8 = ssub.s32 1, %s6
  %s9 = scalar_select 0, %s8, %s6
  $region1: #{tpu_custom_call.1} parent=0
    #allocation2 [shape = 'u8[4096]{0}', space=vmem, size = 0x1000, scoped, tag = 'input window, operand 0, single buffered']
    #allocation3 [shape = 's32[1]{0}', space=sflag, size = 0x4, scoped, tag = 'scoped memory for tpu_custom_call.1']
    #allocation4 [shape = 's32[1]{0}', space=sflag, size = 0x4, scoped, tag = 'scoped memory for tpu_custom_call.1']
    #allocation5 [shape = 'u8[16384]{0}', space=vmem, size = 0x4000, scoped, tag = 'input window, operand 1, single buffered']
    #allocation6 [shape = 's32[1]{0}', space=sflag, size = 0x4, scoped, tag = 'scoped memory for tpu_custom_call.1']
    #allocation7 [shape = 'u8[65536]{0}', space=vmem, size = 0x10000, scoped, tag = 'input window, operand 3, single buffered']
    #allocation8 [shape = 'u8[4096]{0}', space=vmem, size = 0x1000, scoped, tag = 'output window, operand 0, single buffered']
    %10 = vsyncpa [#allocation3], 0
    %11 = vsyncpa [#allocation6], 0
    %12 = vsyncpa [#allocation4], 0
    // Predicated region
    $region2: #{tpu_custom_call.1} parent=1 // pred_check
      _
    $region3: #{tpu_custom_call.1} parent=1 // pred_check_branch
      %14 = sbr.rel (0) target = $region5
    $region4: #{tpu_custom_call.1} parent=1 // pred_region
      %16 = vsyncadd [#allocation3], 0
      %s18 = sshll.u32 %s0, 4
      %s19 = int_to_ptr.hbm [resolvable:$true] %s18
      %s20 = sshll.u32 [#allocation2], 4
      %s21 = int_to_ptr.vmem [resolvable:$true] %s20
      %23 = dma.hbm_to_vmem [thread:$0]  %s19, 128, %s21, [#allocation3]
    $region5: #{tpu_custom_call.1} parent=1 // pred_fallthru
      _
    // Predicated region
    $region6: #{tpu_custom_call.1} parent=1 // pred_check
      _
    $region7: #{tpu_custom_call.1} parent=1 // pred_check_branch
      %25 = sbr.rel (0) target = $region9
    $region8: #{tpu_custom_call.1} parent=1 // pred_region
      %27 = vsyncadd [#allocation6], 0
      %s28 = sshll.u32 %s1, 4
      %s29 = int_to_ptr.hbm [resolvable:$true] %s28
      %s30 = sshll.u32 [#allocation5], 4
      %s31 = int_to_ptr.vmem [resolvable:$true] %s30
      %36 = dma.hbm_to_vmem [thread:$0]  %s29, 512, %s31, [#allocation6], 128, 128, 8
    $region9: #{tpu_custom_call.1} parent=1 // pred_fallthru
      _
    // Predicated region
    $region10: #{tpu_custom_call.1} parent=1 // pred_check
      _
    $region11: #{tpu_custom_call.1} parent=1 // pred_check_branch
      %38 = sbr.rel (0) target = $region13
    $region12: #{tpu_custom_call.1} parent=1 // pred_region
      _
    $region13: #{tpu_custom_call.1} parent=1 // pred_fallthru
      _
    // Predicated region
    $region14: #{tpu_custom_call.1} parent=1 // pred_check
      _
    $region15: #{tpu_custom_call.1} parent=1 // pred_check_branch
      %40 = sbr.rel (0) target = $region17
    $region16: #{tpu_custom_call.1} parent=1 // pred_region
      %42 = vsyncadd [#allocation6], 0
      %s43 = sshll.u32 %s3, 4
      %s44 = int_to_ptr.hbm [resolvable:$true] %s43
      %s45 = sshll.u32 [#allocation7], 4
      %s46 = int_to_ptr.vmem [resolvable:$true] %s45
      %51 = dma.hbm_to_vmem [thread:$0]  %s44, 2048, %s46, [#allocation6], 128, 128, 8
    $region17: #{tpu_custom_call.1} parent=1 // pred_fallthru
      _
    // Predicated region
    $region18: #{tpu_custom_call.1} parent=1 // pred_check
      _
    $region19: #{tpu_custom_call.1} parent=1 // pred_check_branch
      %53 = sbr.rel (0) target = $region21
    $region20: #{tpu_custom_call.1} parent=1 // pred_region
      _
    $region21: #{tpu_custom_call.1} parent=1 // pred_fallthru
      _
    // Predicated region
    $region22: #{tpu_custom_call.1} parent=1 // pred_check
      _
    $region23: #{tpu_custom_call.1} parent=1 // pred_check_branch
      %55 = sbr.rel (0) target = $region25
    $region24: #{tpu_custom_call.1} parent=1 // pred_region
      %57 = dma.done [#allocation3], 128
    $region25: #{tpu_custom_call.1} parent=1 // pred_fallthru
      _
    // Predicated region
    $region26: #{tpu_custom_call.1} parent=1 // pred_check
      _
    $region27: #{tpu_custom_call.1} parent=1 // pred_check_branch
      %59 = sbr.rel (0) target = $region29
    $region28: #{tpu_custom_call.1} parent=1 // pred_region
      %61 = dma.done [#allocation6], 512
    $region29: #{tpu_custom_call.1} parent=1 // pred_fallthru
      _
    // Predicated region
    $region30: #{tpu_custom_call.1} parent=1 // pred_check
      _
    $region31: #{tpu_custom_call.1} parent=1 // pred_check_branch
      %63 = sbr.rel (0) target = $region33
    $region32: #{tpu_custom_call.1} parent=1 // pred_region
      %65 = dma.done [#allocation6], 2048
    $region33: #{tpu_custom_call.1} parent=1 // pred_fallthru
      _
    %v66 = vld [vmem:[#allocation2] sm:$0xff]
    %v67 = vld [vmem:[#allocation5] sm:$0xff]
    %v68 = vld [vmem:[#allocation5 + $0x8] sm:$0xff]
    %v69 = vld [vmem:[#allocation5 + $0x10] sm:$0xff]
    %v70 = vld [vmem:[#allocation5 + $0x18] sm:$0xff]
    %v71 = vld [vmem:[%s2] sm:$0x1]
    %v73 = vperm.slane %v71, 0
    %vm75 = vcmask 261120
    %v77 = vsel %vm75, %v66, 0
    %79 = vmatpush.msra.mxu0 0.0
    %80 = vmatpush.msra.mxu0 0.0
    %81 = vmatpush.msra.mxu0 0.0
    %82 = vmatpush.msra.mxu0 0.0
    %83 = vmatpush.msra.mxu0 0.0
    %84 = vmatpush.msra.mxu0 0.0
    %85 = vmatpush.msra.mxu0 0.0
    %86 = vmatpush.msra.mxu0 0.0
    %87 = vmatpush.msra.mxu0 0.0
    %88 = vmatpush.msra.mxu0 0.0
    %89 = vmatpush.msra.mxu0 0.0
    %90 = vmatpush.msra.mxu0 0.0
    %91 = vmatpush.msra.mxu0 %v70
    %92 = vmatpush.msra.mxu0 %v69
    %93 = vmatpush.msra.mxu0 %v68
    %94 = vmatpush.msra.mxu0 %v67
    %95 = vmatmul.f32.gmra.mxu0 %v77
    %v96 = vpop.f32.mrf.mxu0
    %v97 = vadd.f32 %v73, %v96
    %98 = vdwg.mxu0
    %v99 = vtanh.pop %v97
    %v100 = vld [vmem:[#allocation7] sm:$0xff]
    %v101 = vld [vmem:[#allocation7 + $0x8] sm:$0xff]
    %v102 = vld [vmem:[#allocation7 + $0x10] sm:$0xff]
    %v103 = vld [vmem:[#allocation7 + $0x18] sm:$0xff]
    %v104 = vld [vmem:[#allocation7 + $0x20] sm:$0xff]
    %v105 = vld [vmem:[#allocation7 + $0x28] sm:$0xff]
    %v106 = vld [vmem:[#allocation7 + $0x30] sm:$0xff]
    %v107 = vld [vmem:[#allocation7 + $0x38] sm:$0xff]
    %v108 = vld [vmem:[#allocation7 + $0x40] sm:$0xff]
    %v109 = vld [vmem:[#allocation7 + $0x48] sm:$0xff]
    %v110 = vld [vmem:[#allocation7 + $0x50] sm:$0xff]
    %v111 = vld [vmem:[#allocation7 + $0x58] sm:$0xff]
    %v112 = vld [vmem:[#allocation7 + $0x60] sm:$0xff]
    %v113 = vld [vmem:[#allocation7 + $0x68] sm:$0xff]
    %v114 = vld [vmem:[#allocation7 + $0x70] sm:$0xff]
    %v115 = vld [vmem:[#allocation7 + $0x78] sm:$0xff]
    %v116 = vld [vmem:[%s4] sm:$0x1]
    %v118 = vperm.slane %v116, 0
    %120 = vmatpush.msra.mxu0 %v115
    %121 = vmatpush.msra.mxu0 %v114
    %122 = vmatpush.msra.mxu0 %v113
    %123 = vmatpush.msra.mxu0 %v112
    %124 = vmatpush.msra.mxu0 %v111
    %125 = vmatpush.msra.mxu0 %v110
    %126 = vmatpush.msra.mxu0 %v109
    %127 = vmatpush.msra.mxu0 %v108
    %128 = vmatpush.msra.mxu0 %v107
    %129 = vmatpush.msra.mxu0 %v106
    %130 = vmatpush.msra.mxu0 %v105
    %131 = vmatpush.msra.mxu0 %v104
    %132 = vmatpush.msra.mxu0 %v103
    %133 = vmatpush.msra.mxu0 %v102
    %134 = vmatpush.msra.mxu0 %v101
    %135 = vmatpush.msra.mxu0 %v100
    %136 = vmatmul.f32.gmra.mxu0 %v99
    %v137 = vpop.f32.mrf.mxu0
    %v138 = vadd.f32 %v118, %v137
    %139 = vdwg.mxu0
    %140 = vst [vmem:[#allocation8] sm:$0xff] %v138
    // Predicated region
    $region34: #{tpu_custom_call.1} parent=1 // pred_check
      _
    $region35: #{tpu_custom_call.1} parent=1 // pred_check_branch
      %142 = sbr.rel (0) target = $region37
    $region36: #{tpu_custom_call.1} parent=1 // pred_region
      %144 = vsyncadd [#allocation4], 0
      %s146 = sshll.u32 [#allocation8], 4
      %s147 = int_to_ptr.vmem [resolvable:$true] %s146
      %s148 = sshll.u32 %s5, 4
      %s149 = int_to_ptr.hbm [resolvable:$true] %s148
      %151 = dma.vmem_to_hbm [thread:$0]  %s147, 128, %s149, [#allocation4]
    $region37: #{tpu_custom_call.1} parent=1 // pred_fallthru
      _
    // Predicated region
    $region38: #{tpu_custom_call.1} parent=1 // pred_check
      _
    $region39: #{tpu_custom_call.1} parent=1 // pred_check_branch
      %153 = sbr.rel (0) target = $region41
    $region40: #{tpu_custom_call.1} parent=1 // pred_region
      %155 = dma.done [#allocation4], 128
    $region41: #{tpu_custom_call.1} parent=1 // pred_fallthru
      _
    %156 = vsyncpa [#allocation3], 1
    %157 = vsyncpa [#allocation6], 1
    %158 = vsyncpa [#allocation4], 1

// kernel: tpu_custom_call.1
$region0: #{tpu_custom_call.1}
  #allocation0 [shape = 'u32[]', space=smem, size = 0x4, offset = 0x4, fixed_abs, tag = 'smem constant byte address 0x4 - core index']
  #allocation1 [shape = 'u32[72,128]{1,0:T(1,128)}', space=vmem, size = 0x9000, scoped, tag = 'internal scratch']
  %s0 = inlined_call_operand.hbm [shape: f32[8,32], index: 0, kind: input, shape index: {}]
  %s1 = inlined_call_operand.hbm [shape: f32[32,128], index: 1, kind: input, shape index: {}]
  %s2 = inlined_call_operand.vmem [shape: f32[1,128], index: 2, kind: input, shape index: {}]
  %s3 = inlined_call_operand.hbm [shape: f32[128,128], index: 3, kind: input, shape index: {}]
  %s4 = inlined_call_operand.vmem [shape: f32[1,128], index: 4, kind: input, shape index: {}]
  %s5 = inlined_call_operand.hbm [shape: f32[8,128], index: 5, kind: output, shape index: {}]
  %s6 = sld [smem:[#allocation0]]
  $region42: #{tpu_custom_call.1} parent=0
    _
  %s8 = ssub.s32 1, %s6
  %s9 = scalar_select 0, %s8, %s6
  $region1: #{tpu_custom_call.1} parent=0
    #allocation2 [shape = 'u8[4096]{0}', space=vmem, size = 0x1000, scoped, tag = 'input window, operand 0, single buffered']
    #allocation3 [shape = 's32[1]{0}', space=sflag, size = 0x4, scoped, tag = 'scoped memory for tpu_custom_call.1']
    #allocation4 [shape = 's32[1]{0}', space=sflag, size = 0x4, scoped, tag = 'scoped memory for tpu_custom_call.1']
    #allocation5 [shape = 'u8[16384]{0}', space=vmem, size = 0x4000, scoped, tag = 'input window, operand 1, single buffered']
    #allocation6 [shape = 's32[1]{0}', space=sflag, size = 0x4, scoped, tag = 'scoped memory for tpu_custom_call.1']
    #allocation7 [shape = 'u8[65536]{0}', space=vmem, size = 0x10000, scoped, tag = 'input window, operand 3, single buffered']
    #allocation8 [shape = 'u8[4096]{0}', space=vmem, size = 0x1000, scoped, tag = 'output window, operand 0, single buffered']
    %10 = vsyncpa [#allocation3], 0
    %11 = vsyncpa [#allocation6], 0
    %12 = vsyncpa [#allocation4], 0
    // Predicated region
    $region2: #{tpu_custom_call.1} parent=1 // pred_check
      _
    $region3: #{tpu_custom_call.1} parent=1 // pred_check_branch
      %14 = sbr.rel (0) target = $region5
    $region4: #{tpu_custom_call.1} parent=1 // pred_region
      %16 = vsyncadd [#allocation3], 0
      %s18 = sshll.u32 %s0, 4
      %s19 = int_to_ptr.hbm [resolvable:$true] %s18
      %s20 = sshll.u32 [#allocation2], 4
      %s21 = int_to_ptr.vmem [resolvable:$true] %s20
      %23 = dma.hbm_to_vmem [thread:$0]  %s19, 128, %s21, [#allocation3]
    $region5: #{tpu_custom_call.1} parent=1 // pred_fallthru
      _
    // Predicated region
    $region6: #{tpu_custom_call.1} parent=1 // pred_check
      _
    $region7: #{tpu_custom_call.1} parent=1 // pred_check_branch
      %25 = sbr.rel (0) target = $region9
    $region8: #{tpu_custom_call.1} parent=1 // pred_region
      %27 = vsyncadd [#allocation6], 0
      %s28 = sshll.u32 %s1, 4
      %s29 = int_to_ptr.hbm [resolvable:$true] %s28
      %s30 = sshll.u32 [#allocation5], 4
      %s31 = int_to_ptr.vmem [resolvable:$true] %s30
      %36 = dma.hbm_to_vmem [thread:$0]  %s29, 512, %s31, [#allocation6], 128, 128, 8
    $region9: #{tpu_custom_call.1} parent=1 // pred_fallthru
      _
    // Predicated region
    $region10: #{tpu_custom_call.1} parent=1 // pred_check
      _
    $region11: #{tpu_custom_call.1} parent=1 // pred_check_branch
      %38 = sbr.rel (0) target = $region13
    $region12: #{tpu_custom_call.1} parent=1 // pred_region
      _
    $region13: #{tpu_custom_call.1} parent=1 // pred_fallthru
      _
    // Predicated region
    $region14: #{tpu_custom_call.1} parent=1 // pred_check
      _
    $region15: #{tpu_custom_call.1} parent=1 // pred_check_branch
      %40 = sbr.rel (0) target = $region17
    $region16: #{tpu_custom_call.1} parent=1 // pred_region
      %42 = vsyncadd [#allocation6], 0
      %s43 = sshll.u32 %s3, 4
      %s44 = int_to_ptr.hbm [resolvable:$true] %s43
      %s45 = sshll.u32 [#allocation7], 4
      %s46 = int_to_ptr.vmem [resolvable:$true] %s45
      %51 = dma.hbm_to_vmem [thread:$0]  %s44, 2048, %s46, [#allocation6], 128, 128, 8
    $region17: #{tpu_custom_call.1} parent=1 // pred_fallthru
      _
    // Predicated region
    $region18: #{tpu_custom_call.1} parent=1 // pred_check
      _
    $region19: #{tpu_custom_call.1} parent=1 // pred_check_branch
      %53 = sbr.rel (0) target = $region21
    $region20: #{tpu_custom_call.1} parent=1 // pred_region
      _
    $region21: #{tpu_custom_call.1} parent=1 // pred_fallthru
      _
    // Predicated region
    $region22: #{tpu_custom_call.1} parent=1 // pred_check
      _
    $region23: #{tpu_custom_call.1} parent=1 // pred_check_branch
      %55 = sbr.rel (0) target = $region25
    $region24: #{tpu_custom_call.1} parent=1 // pred_region
      %57 = dma.done [#allocation3], 128
    $region25: #{tpu_custom_call.1} parent=1 // pred_fallthru
      _
    // Predicated region
    $region26: #{tpu_custom_call.1} parent=1 // pred_check
      _
    $region27: #{tpu_custom_call.1} parent=1 // pred_check_branch
      %59 = sbr.rel (0) target = $region29
    $region28: #{tpu_custom_call.1} parent=1 // pred_region
      %61 = dma.done [#allocation6], 512
    $region29: #{tpu_custom_call.1} parent=1 // pred_fallthru
      _
    // Predicated region
    $region30: #{tpu_custom_call.1} parent=1 // pred_check
      _
    $region31: #{tpu_custom_call.1} parent=1 // pred_check_branch
      %63 = sbr.rel (0) target = $region33
    $region32: #{tpu_custom_call.1} parent=1 // pred_region
      %65 = dma.done [#allocation6], 2048
    $region33: #{tpu_custom_call.1} parent=1 // pred_fallthru
      _
    %v66 = vld [vmem:[#allocation2] sm:$0xff]
    %v67 = vld [vmem:[#allocation5] sm:$0xff]
    %v68 = vld [vmem:[#allocation5 + $0x8] sm:$0xff]
    %v69 = vld [vmem:[#allocation5 + $0x10] sm:$0xff]
    %v70 = vld [vmem:[#allocation5 + $0x18] sm:$0xff]
    %v71 = vld [vmem:[%s2] sm:$0x1]
    %v73 = vperm.slane %v71, 0
    %vm75 = vcmask 261120
    %v77 = vsel %vm75, %v66, 0
    %79 = vmatpush.msra.mxu0 0.0
    %80 = vmatpush.msra.mxu0 0.0
    %81 = vmatpush.msra.mxu0 0.0
    %82 = vmatpush.msra.mxu0 0.0
    %83 = vmatpush.msra.mxu0 0.0
    %84 = vmatpush.msra.mxu0 0.0
    %85 = vmatpush.msra.mxu0 0.0
    %86 = vmatpush.msra.mxu0 0.0
    %87 = vmatpush.msra.mxu0 0.0
    %88 = vmatpush.msra.mxu0 0.0
    %89 = vmatpush.msra.mxu0 0.0
    %90 = vmatpush.msra.mxu0 0.0
    %91 = vmatpush.msra.mxu0 %v70
    %92 = vmatpush.msra.mxu0 %v69
    %93 = vmatpush.msra.mxu0 %v68
    %94 = vmatpush.msra.mxu0 %v67
    %95 = vmatmul.f32.gmra.mxu0 %v77
    %v96 = vpop.f32.mrf.mxu0
    %v97 = vadd.f32 %v73, %v96
    %98 = vdwg.mxu0
    %v99 = vtanh.pop %v97
    %v100 = vld [vmem:[#allocation7] sm:$0xff]
    %v101 = vld [vmem:[#allocation7 + $0x8] sm:$0xff]
    %v102 = vld [vmem:[#allocation7 + $0x10] sm:$0xff]
    %v103 = vld [vmem:[#allocation7 + $0x18] sm:$0xff]
    %v104 = vld [vmem:[#allocation7 + $0x20] sm:$0xff]
    %v105 = vld [vmem:[#allocation7 + $0x28] sm:$0xff]
    %v106 = vld [vmem:[#allocation7 + $0x30] sm:$0xff]
    %v107 = vld [vmem:[#allocation7 + $0x38] sm:$0xff]
    %v108 = vld [vmem:[#allocation7 + $0x40] sm:$0xff]
    %v109 = vld [vmem:[#allocation7 + $0x48] sm:$0xff]
    %v110 = vld [vmem:[#allocation7 + $0x50] sm:$0xff]
    %v111 = vld [vmem:[#allocation7 + $0x58] sm:$0xff]
    %v112 = vld [vmem:[#allocation7 + $0x60] sm:$0xff]
    %v113 = vld [vmem:[#allocation7 + $0x68] sm:$0xff]
    %v114 = vld [vmem:[#allocation7 + $0x70] sm:$0xff]
    %v115 = vld [vmem:[#allocation7 + $0x78] sm:$0xff]
    %v116 = vld [vmem:[%s4] sm:$0x1]
    %v118 = vperm.slane %v116, 0
    %120 = vmatpush.msra.mxu0 %v115
    %121 = vmatpush.msra.mxu0 %v114
    %122 = vmatpush.msra.mxu0 %v113
    %123 = vmatpush.msra.mxu0 %v112
    %124 = vmatpush.msra.mxu0 %v111
    %125 = vmatpush.msra.mxu0 %v110
    %126 = vmatpush.msra.mxu0 %v109
    %127 = vmatpush.msra.mxu0 %v108
    %128 = vmatpush.msra.mxu0 %v107
    %129 = vmatpush.msra.mxu0 %v106
    %130 = vmatpush.msra.mxu0 %v105
    %131 = vmatpush.msra.mxu0 %v104
    %132 = vmatpush.msra.mxu0 %v103
    %133 = vmatpush.msra.mxu0 %v102
    %134 = vmatpush.msra.mxu0 %v101
    %135 = vmatpush.msra.mxu0 %v100
    %136 = vmatmul.f32.gmra.mxu0 %v99
    %v137 = vpop.f32.mrf.mxu0
    %v138 = vadd.f32 %v118, %v137
    %139 = vdwg.mxu0
    %140 = vst [vmem:[#allocation8] sm:$0xff] %v138
    // Predicated region
    $region34: #{tpu_custom_call.1} parent=1 // pred_check
      _
    $region35: #{tpu_custom_call.1} parent=1 // pred_check_branch
      %142 = sbr.rel (0) target = $region37
    $region36: #{tpu_custom_call.1} parent=1 // pred_region
      %144 = vsyncadd [#allocation4], 0
      %s146 = sshll.u32 [#allocation8], 4
      %s147 = int_to_ptr.vmem [resolvable:$true] %s146
      %s148 = sshll.u32 %s5, 4
      %s149 = int_to_ptr.hbm [resolvable:$true] %s148
      %151 = dma.vmem_to_hbm [thread:$0]  %s147, 128, %s149, [#allocation4]
    $region37: #{tpu_custom_call.1} parent=1 // pred_fallthru
      _
    // Predicated region
    $region38: #{tpu_custom_call.1} parent=1 // pred_check
      _
    $region39: #{tpu_custom_call.1} parent=1 // pred_check_branch
      %153 = sbr.rel (0) target = $region41
    $region40: #{tpu_custom_call.1} parent=1 // pred_region
      %155 = dma.done [#allocation4], 128
    $region41: #{tpu_custom_call.1} parent=1 // pred_fallthru
      _
    %156 = vsyncpa [#allocation3], 1
    %157 = vsyncpa [#allocation6], 1
    %158 = vsyncpa [#allocation4], 1

</llo_original>
